<compile_context>
chip_gen: v6e
topology: v6e:2x2x1
jax: 0.10.0
libtpu: 0.0.40
codegen_flags: <defaults>
</compile_context>

<pallas_src>
import jax
import jax.numpy as jnp
from jax import lax
from jax.experimental import pallas as pl
from jax.experimental.pallas import tpu as pltpu


def _round_up(x, m):
    return ((x + m - 1) // m) * m


def _disblock_kernel(w_ref, x_ref, o_ref):
    """One grid point = one M-tile.

    w_ref : (Cout_pad, K_pad)  folded conv weight (resident across the whole grid)
    x_ref : (K_pad, TM)        im2col columns for this tile (lane-dense)
    o_ref : (Cout_pad, TM)     output tile (lane-dense)
    """
    y = jnp.dot(w_ref[...], x_ref[...], preferred_element_type=jnp.float32)
    # LeakyReLU(0.2) epilogue
    o_ref[...] = jnp.where(y > 0.0, y, 0.2 * y).astype(o_ref.dtype)


def disblock_forward(x_nchw, weight, stride, pad):
    """x_nchw: (N, Cin, H, W) float32.  weight: (Cout, Cin, KH, KW) (PyTorch layout)."""
    N, C_in, H, W = x_nchw.shape
    C_out, C_in_w, KH, KW = weight.shape
    assert C_in == C_in_w

    OH = (H + 2 * pad - KH) // stride + 1
    OW = (W + 2 * pad - KW) // stride + 1
    M = N * OH * OW
    K = KH * KW * C_in

    # ---- tiling / padding choices ------------------------------------------
    K_pad = _round_up(K, 128)          # full-lane, unmasked contraction dim
    C_out_pad = _round_up(C_out, 8)    # sublane-aligned output rows
    TM = min(1024, _round_up(M, 128))  # large M tiles (mem-bound roofline)
    M_pad = _round_up(M, TM)
    n_tiles = M_pad // TM

    # ---- glue (pure data movement, done in XLA) ------------------------------
    # Build the transposed im2col matrix (K, M): row index = (kh*KW + kw)*Cin + cin.
    xp = jnp.pad(x_nchw, ((0, 0), (0, 0), (pad, pad), (pad, pad)))
    taps = []
    for kh in range(KH):
        for kw in range(KW):
            patch = lax.slice(
                xp,
                (0, 0, kh, kw),
                (N, C_in, kh + (OH - 1) * stride + 1, kw + (OW - 1) * stride + 1),
                (1, 1, stride, stride),
            )  # (N, Cin, OH, OW)
            taps.append(jnp.transpose(patch, (1, 0, 2, 3)).reshape(C_in, M))
    x_col_t = jnp.concatenate(taps, axis=0)                       # (K, M)
    x_col_t = jnp.pad(x_col_t, ((0, K_pad - K), (0, M_pad - M)))  # (K_pad, M_pad)

    # Fold weight (Cout, Cin, KH, KW) -> (Cout, KH, KW, Cin) -> (Cout, K), matching K order.
    w_t = jnp.transpose(weight, (0, 2, 3, 1)).reshape(C_out, K)
    w_t = jnp.pad(w_t, ((0, C_out_pad - C_out), (0, K_pad - K)))  # (Cout_pad, K_pad)

    # ---- Pallas hot path: single fused matmul + LeakyReLU --------------------
    out_t = pl.pallas_call(
        _disblock_kernel,
        out_shape=jax.ShapeDtypeStruct((C_out_pad, M_pad), jnp.float32),
        grid_spec=pltpu.PrefetchScalarGridSpec(
            num_scalar_prefetch=0,
            grid=(n_tiles,),
            in_specs=[
                pl.BlockSpec((C_out_pad, K_pad), lambda i: (0, 0)),  # weight: VMEM-resident
                pl.BlockSpec((K_pad, TM), lambda i: (0, i)),         # im2col columns
            ],
            out_specs=pl.BlockSpec((C_out_pad, TM), lambda i: (0, i)),
        ),
        compiler_params=pltpu.CompilerParams(
            dimension_semantics=("parallel",)
        ),
    )(w_t, x_col_t)

    # (Cout_pad, M_pad) -> (Cout, M) -> (Cout, N, OH, OW) -> NCHW
    out = out_t[:C_out, :M].reshape(C_out, N, OH, OW)
    return jnp.transpose(out, (1, 0, 2, 3))


def _reference(x_nchw, weight, stride, pad):
    y = lax.conv_general_dilated(
        x_nchw, weight,
        window_strides=(stride, stride),
        padding=((pad, pad), (pad, pad)),
        dimension_numbers=("NCHW", "OIHW", "NCHW"),
    )
    return jnp.where(y > 0, y, 0.2 * y)


if __name__ == "__main__":
    # DisBlock(inc=4, ouc=8, str=2, filtSize=5, pad=2)
    inc, ouc, stride, filt, pad = 4, 8, 2, 5, 2

    key = jax.random.PRNGKey(0)
    kx, kw = jax.random.split(key)
    x = jax.random.normal(kx, (2, inc, 16, 16), dtype=jnp.float32)
    # deterministic synthetic conv weight, PyTorch layout (Cout, Cin, KH, KW)
    w = 0.1 * jax.random.normal(kw, (ouc, inc, filt, filt), dtype=jnp.float32)

    out = disblock_forward(x, w, stride, pad)
    out = jax.block_until_ready(out)

    ref = jax.block_until_ready(_reference(x, w, stride, pad))
    assert out.shape == ref.shape == (2, ouc, 8, 8)
    assert jnp.allclose(out, ref, rtol=1e-4, atol=1e-4)

    print("KERNEL_OK")
</pallas_src>

<mosaic_0001>
module attributes {stable_mosaic.version = 11 : i64} {
  func.func @_disblock_kernel(%arg0: i32, %arg1: memref<8x128xf32, #tpu.memory_space<vmem>>, %arg2: memref<128x128xf32, #tpu.memory_space<vmem>>, %arg3: memref<8x128xf32, #tpu.memory_space<vmem>>) attributes {dimension_semantics = [#tpu.dimension_semantics<parallel>], iteration_bounds = array<i64: 1>, scalar_prefetch = 0 : i64, scratch_operands = 0 : i64, tpu.core_type = #tpu.core_type<tc>, window_params = [{pipeline_mode = #tpu.pipeline_mode<synchronous>, transform_indices = @transform_0, window_bounds = array<i64: 8, 128>}, {transform_indices = @transform_1, window_bounds = array<i64: 128, 128>}, {transform_indices = @transform_2, window_bounds = array<i64: 8, 128>}]} {
    %c0 = arith.constant 0 : index
    %c0_0 = arith.constant 0 : index
    %0 = vector.load %arg1[%c0, %c0_0] : memref<8x128xf32, #tpu.memory_space<vmem>>, vector<8x128xf32>
    %c0_1 = arith.constant 0 : index
    %c0_2 = arith.constant 0 : index
    %1 = vector.load %arg2[%c0_1, %c0_2] : memref<128x128xf32, #tpu.memory_space<vmem>>, vector<128x128xf32>
    %cst = arith.constant dense<0.000000e+00> : vector<8x128xf32>
    %2 = tpu.matmul %0, %1, %cst {dimension_numbers = #tpu.dot_dimension_numbers<[1], [0], [0], [1], [0, 0, 1, 1], [], []>} : vector<8x128xf32>, vector<128x128xf32>, vector<8x128xf32> -> vector<8x128xf32>
    %cst_3 = arith.constant 0.000000e+00 : f32
    %3 = vector.broadcast %cst_3 : f32 to vector<8x128xf32>
    %4 = arith.cmpf ogt, %2, %3 : vector<8x128xf32>
    %cst_4 = arith.constant 2.000000e-01 : f32
    %5 = vector.broadcast %cst_4 : f32 to vector<8x128xf32>
    %6 = arith.mulf %5, %2 : vector<8x128xf32>
    %7 = arith.select %4, %2, %6 : vector<8x128xi1>, vector<8x128xf32>
    %c0_5 = arith.constant 0 : index
    %c0_6 = arith.constant 0 : index
    %8 = vector.load %arg3[%c0_5, %c0_6] : memref<8x128xf32, #tpu.memory_space<vmem>>, vector<8x128xf32>
    tpu.vector_store %arg3[%c0_5, %c0_6], %7 {strides = array<i32>} : memref<8x128xf32, #tpu.memory_space<vmem>>, vector<8x128xf32>,
    return
  }
  func.func @transform_0(%arg0: i32) -> (i32, i32) {
    %c0_i32 = arith.constant 0 : i32
    %c0_i32_0 = arith.constant 0 : i32
    %c0_i32_1 = arith.constant 0 : i32
    return %c0_i32, %c0_i32_0 : i32, i32
  }
  func.func @transform_1(%arg0: i32) -> (i32, i32) {
    %c0_i32 = arith.constant 0 : i32
    %c0_i32_0 = arith.constant 0 : i32
    return %c0_i32, %arg0 : i32, i32
  }
  func.func @transform_2(%arg0: i32) -> (i32, i32) {
    %c0_i32 = arith.constant 0 : i32
    %c0_i32_0 = arith.constant 0 : i32
    return %c0_i32, %arg0 : i32, i32
  }
}

</mosaic_0001>

<llo_original>
// kernel: tpu_custom_call.1
$region0: #{tpu_custom_call.1}
  #allocation0 [shape = 'u32[]', space=smem, size = 0x4, offset = 0x4, fixed_abs, tag = 'smem constant byte address 0x4 - core index']
  #allocation1 [shape = 'u32[144,128]{1,0:T(1,128)}', space=vmem, size = 0x12000, scoped, tag = 'internal scratch']
  %s0 = inlined_call_operand.hbm [shape: f32[8,128], index: 0, kind: input, shape index: {}]
  %s1 = inlined_call_operand.hbm [shape: f32[128,128], index: 1, kind: input, shape index: {}]
  %s2 = inlined_call_operand.hbm [shape: f32[8,128], index: 2, kind: output, shape index: {}]
  %s3 = sld [smem:[#allocation0]]
  $region26: #{tpu_custom_call.1} parent=0
    _
  %s5 = ssub.s32 1, %s3
  %s6 = scalar_select 0, %s5, %s3
  $region1: #{tpu_custom_call.1} parent=0
    #allocation2 [shape = 'u8[4096]{0}', space=vmem, size = 0x1000, scoped, tag = 'input window, operand 0, single buffered']
    #allocation3 [shape = 's32[1]{0}', space=sflag, size = 0x4, scoped, tag = 'scoped memory for tpu_custom_call.1']
    #allocation4 [shape = 's32[1]{0}', space=sflag, size = 0x4, scoped, tag = 'scoped memory for tpu_custom_call.1']
    #allocation5 [shape = 'u8[65536]{0}', space=vmem, size = 0x10000, scoped, tag = 'input window, operand 1, single buffered']
    #allocation6 [shape = 's32[1]{0}', space=sflag, size = 0x4, scoped, tag = 'scoped memory for tpu_custom_call.1']
    #allocation7 [shape = 'u8[4096]{0}', space=vmem, size = 0x1000, scoped, tag = 'output window, operand 0, single buffered']
    %7 = vsyncpa [#allocation3], 0
    %8 = vsyncpa [#allocation6], 0
    %9 = vsyncpa [#allocation4], 0
    // Predicated region
    $region2: #{tpu_custom_call.1} parent=1 // pred_check
      _
    $region3: #{tpu_custom_call.1} parent=1 // pred_check_branch
      %11 = sbr.rel (0) target = $region5
    $region4: #{tpu_custom_call.1} parent=1 // pred_region
      %s13 = ssub.s32 128, 128
      %14 = vsyncadd [#allocation3], %s13
      %s16 = sshll.u32 [#allocation2], 4
      %s17 = int_to_ptr.vmem [resolvable:$true] %s16
      %19 = dma.hbm_to_vmem [thread:$0]  %s0, 128, %s17, [#allocation3]
    $region5: #{tpu_custom_call.1} parent=1 // pred_fallthru
      _
    // Predicated region
    $region6: #{tpu_custom_call.1} parent=1 // pred_check
      _
    $region7: #{tpu_custom_call.1} parent=1 // pred_check_branch
      %21 = sbr.rel (0) target = $region9
    $region8: #{tpu_custom_call.1} parent=1 // pred_region
      %s23 = ssub.s32 2048, 2048
      %24 = vsyncadd [#allocation6], %s23
      %s25 = sshll.u32 [#allocation5], 4
      %s26 = int_to_ptr.vmem [resolvable:$true] %s25
      %31 = dma.hbm_to_vmem [thread:$0]  %s1, 2048, %s26, [#allocation6], 128, 128, 8
    $region9: #{tpu_custom_call.1} parent=1 // pred_fallthru
      _
    // Predicated region
    $region10: #{tpu_custom_call.1} parent=1 // pred_check
      _
    $region11: #{tpu_custom_call.1} parent=1 // pred_check_branch
      %33 = sbr.rel (0) target = $region13
    $region12: #{tpu_custom_call.1} parent=1 // pred_region
      %34 = dma.done [#allocation3], 128
    $region13: #{tpu_custom_call.1} parent=1 // pred_fallthru
      _
    // Predicated region
    $region14: #{tpu_custom_call.1} parent=1 // pred_check
      _
    $region15: #{tpu_custom_call.1} parent=1 // pred_check_branch
      %36 = sbr.rel (0) target = $region17
    $region16: #{tpu_custom_call.1} parent=1 // pred_region
      %37 = dma.done [#allocation6], 2048
    $region17: #{tpu_custom_call.1} parent=1 // pred_fallthru
      _
    %v38 = vld [vmem:[#allocation2] sm:$0xff]
    %v39 = vld [vmem:[#allocation5] sm:$0xff]
    %v40 = vld [vmem:[#allocation5 + $0x8] sm:$0xff]
    %v41 = vld [vmem:[#allocation5 + $0x10] sm:$0xff]
    %v42 = vld [vmem:[#allocation5 + $0x18] sm:$0xff]
    %v43 = vld [vmem:[#allocation5 + $0x20] sm:$0xff]
    %v44 = vld [vmem:[#allocation5 + $0x28] sm:$0xff]
    %v45 = vld [vmem:[#allocation5 + $0x30] sm:$0xff]
    %v46 = vld [vmem:[#allocation5 + $0x38] sm:$0xff]
    %v47 = vld [vmem:[#allocation5 + $0x40] sm:$0xff]
    %v48 = vld [vmem:[#allocation5 + $0x48] sm:$0xff]
    %v49 = vld [vmem:[#allocation5 + $0x50] sm:$0xff]
    %v50 = vld [vmem:[#allocation5 + $0x58] sm:$0xff]
    %v51 = vld [vmem:[#allocation5 + $0x60] sm:$0xff]
    %v52 = vld [vmem:[#allocation5 + $0x68] sm:$0xff]
    %v53 = vld [vmem:[#allocation5 + $0x70] sm:$0xff]
    %v54 = vld [vmem:[#allocation5 + $0x78] sm:$0xff]
    %55 = vmatprep.subr.mxu0 0.0
    %56 = vmatpush1.msra.mxu0 %v54
    %57 = vmatprep.subr.mxu0 0.0
    %58 = vmatpush1.msra.mxu0 %v53
    %59 = vmatprep.subr.mxu0 0.0
    %60 = vmatpush1.msra.mxu0 %v52
    %61 = vmatprep.subr.mxu0 0.0
    %62 = vmatpush1.msra.mxu0 %v51
    %63 = vmatprep.subr.mxu0 0.0
    %64 = vmatpush1.msra.mxu0 %v50
    %65 = vmatprep.subr.mxu0 0.0
    %66 = vmatpush1.msra.mxu0 %v49
    %67 = vmatprep.subr.mxu0 0.0
    %68 = vmatpush1.msra.mxu0 %v48
    %69 = vmatprep.subr.mxu0 0.0
    %70 = vmatpush1.msra.mxu0 %v47
    %71 = vmatprep.subr.mxu0 0.0
    %72 = vmatpush1.msra.mxu0 %v46
    %73 = vmatprep.subr.mxu0 0.0
    %74 = vmatpush1.msra.mxu0 %v45
    %75 = vmatprep.subr.mxu0 0.0
    %76 = vmatpush1.msra.mxu0 %v44
    %77 = vmatprep.subr.mxu0 0.0
    %78 = vmatpush1.msra.mxu0 %v43
    %79 = vmatprep.subr.mxu0 0.0
    %80 = vmatpush1.msra.mxu0 %v42
    %81 = vmatprep.subr.mxu0 0.0
    %82 = vmatpush1.msra.mxu0 %v41
    %83 = vmatprep.subr.mxu0 0.0
    %84 = vmatpush1.msra.mxu0 %v40
    %85 = vmatprep.subr.mxu0 0.0
    %86 = vmatpush1.msra.mxu0 %v39
    %87 = vmatprep.subr.mxu0 0.0
    %88 = vmatpush2.msra.mxu0 0.0
    %89 = vmatprep.subr.mxu0 0.0
    %90 = vmatpush2.msra.mxu0 0.0
    %91 = vmatprep.subr.mxu0 0.0
    %92 = vmatpush2.msra.mxu0 0.0
    %93 = vmatprep.subr.mxu0 0.0
    %94 = vmatpush2.msra.mxu0 0.0
    %95 = vmatprep.subr.mxu0 0.0
    %96 = vmatpush2.msra.mxu0 0.0
    %97 = vmatprep.subr.mxu0 0.0
    %98 = vmatpush2.msra.mxu0 0.0
    %99 = vmatprep.subr.mxu0 0.0
    %100 = vmatpush2.msra.mxu0 0.0
    %101 = vmatprep.subr.mxu0 0.0
    %102 = vmatpush2.msra.mxu0 0.0
    %103 = vmatprep.subr.mxu0 0.0
    %104 = vmatpush2.msra.mxu0 0.0
    %105 = vmatprep.subr.mxu0 0.0
    %106 = vmatpush2.msra.mxu0 0.0
    %107 = vmatprep.subr.mxu0 0.0
    %108 = vmatpush2.msra.mxu0 0.0
    %109 = vmatprep.subr.mxu0 0.0
    %110 = vmatpush2.msra.mxu0 0.0
    %111 = vmatprep.subr.mxu0 0.0
    %112 = vmatpush2.msra.mxu0 0.0
    %113 = vmatprep.subr.mxu0 0.0
    %114 = vmatpush2.msra.mxu0 0.0
    %115 = vmatprep.subr.mxu0 0.0
    %116 = vmatpush2.msra.mxu0 0.0
    %117 = vmatprep.subr.mxu0 0.0
    %118 = vmatpush2.msra.mxu0 0.0
    %119 = vmatprep.mubr.f32.mxu0 0.0
    %120 = vmatmul.mubr.f32.gmra.mxu0 %v38
    %v121 = vpop.f32.mrf.mxu0
    %v122 = vadd.f32 0.0, %v121
    %v123 = vpop.f32.mrf.mxu0
    %124 = vdwg.mxu0
    %vm125 = vcmp.gt.f32.partialorder %v122, 0.0
    %v126 = vmul.f32 %v122, 0.2
    %v127 = vsel %vm125, %v122, %v126
    %128 = vst [vmem:[#allocation7] sm:$0xff] %v127
    // Predicated region
    $region18: #{tpu_custom_call.1} parent=1 // pred_check
      _
    $region19: #{tpu_custom_call.1} parent=1 // pred_check_branch
      %130 = sbr.rel (0) target = $region21
    $region20: #{tpu_custom_call.1} parent=1 // pred_region
      %s132 = ssub.s32 128, 128
      %133 = vsyncadd [#allocation4], %s132
      %s135 = sshll.u32 [#allocation7], 4
      %s136 = int_to_ptr.vmem [resolvable:$true] %s135
      %138 = dma.vmem_to_hbm [thread:$0]  %s136, 128, %s2, [#allocation4]
    $region21: #{tpu_custom_call.1} parent=1 // pred_fallthru
      _
    // Predicated region
    $region22: #{tpu_custom_call.1} parent=1 // pred_check
      _
    $region23: #{tpu_custom_call.1} parent=1 // pred_check_branch
      %140 = sbr.rel (0) target = $region25
    $region24: #{tpu_custom_call.1} parent=1 // pred_region
      %141 = dma.done [#allocation4], 128
    $region25: #{tpu_custom_call.1} parent=1 // pred_fallthru
      _
    %142 = vsyncpa [#allocation3], 1
    %143 = vsyncpa [#allocation6], 1
    %144 = vsyncpa [#allocation4], 1

</llo_original>
